<compile_context>
chip_gen: v7x
topology: tpu7x:2x2x1
jax: 0.10.0
libtpu: 0.0.40
codegen_flags: <defaults>
</compile_context>

<pallas_src>
from functools import partial

import jax
import jax.numpy as jnp
from jax.experimental import pallas as pl
from jax.experimental.pallas import tpu as pltpu

LANES = 128
SUBLANES = 8
TARGET_BLOCK_BYTES = 8 * 1024 * 1024      # ~8 MiB of acc-dtype data per DMA
VMEM_LIMIT_BYTES = 32 * 1024 * 1024       # explicit scoped-VMEM request
_F32_EPS = float(jnp.finfo(jnp.float32).eps)


def _acc_dtype_for(dtype):
    # bf16 min/max is exact and natively supported on v6e/v7x (v5e widens it
    # transparently); every other dtype is widened to f32 in-kernel.
    return jnp.bfloat16 if dtype == jnp.bfloat16 else jnp.float32


def _make_minmax_kernel(blk_rows, grid_r, gph, n_full_blocks,
                        valid_rows_last, needs_mask, acc_rows, acc_dtype):
    """Streaming min/max fold over (blk_rows, 128) blocks.

    Outputs are (1, acc_rows, 128) per-core partials that double as the
    accumulators (their block index is constant along the reduction axis)."""

    def kernel(x_ref, min_ref, max_ref):
        c = pl.program_id(0)              # "parallel" axis (megacore split)
        j = pl.program_id(1)              # "arbitrary" reduction axis
        b = c * gph + j                   # global block index (may be >= grid_r)

        @pl.when(j == 0)
        def _init():
            min_ref[...] = jnp.full((1, acc_rows, LANES), jnp.inf, dtype=acc_dtype)
            max_ref[...] = jnp.full((1, acc_rows, LANES), -jnp.inf, dtype=acc_dtype)

        # Hot path: full blocks -> pure vreg-to-vreg min/max on the VPU,
        # hidden under the next block's DMA.
        @pl.when(b < n_full_blocks)
        def _full():
            tile = x_ref[...].astype(acc_dtype)
            g = tile.reshape(blk_rows // acc_rows, acc_rows, LANES)
            min_ref[0] = jnp.minimum(min_ref[0], jnp.min(g, axis=0))
            max_ref[0] = jnp.maximum(max_ref[0], jnp.max(g, axis=0))

        if needs_mask:
            # Ragged (globally last) block: runs exactly once, on the core
            # that owns it, so it never taxes the streaming path.  Rows past
            # valid_rows_last hold undefined pad data and are never touched.
            vg = valid_rows_last // acc_rows          # full acc_rows-row groups
            rem = valid_rows_last % acc_rows          # leftover rows (< acc_rows)

            @pl.when(b == grid_r - 1)
            def _ragged():
                if vg > 0:
                    t = x_ref[0:vg * acc_rows, :].astype(acc_dtype)
                    g = t.reshape(vg, acc_rows, LANES)
                    min_ref[0] = jnp.minimum(min_ref[0], jnp.min(g, axis=0))
                    max_ref[0] = jnp.maximum(max_ref[0], jnp.max(g, axis=0))
                for k in range(rem):                   # <= acc_rows - 1 rows
                    r0 = vg * acc_rows + k
                    row = x_ref[r0:r0 + 1, :].astype(acc_dtype)   # (1, 128)
                    min_ref[0] = jnp.minimum(min_ref[0], row)
                    max_ref[0] = jnp.maximum(max_ref[0], row)

    return kernel


def _tensor_min_max_impl(x, max_block_rows=None):
    """Global (min, max) of an arbitrary-shape tensor.  Returns two f32 scalars."""
    flat = x.reshape(-1)
    n = flat.shape[0]

    acc_dtype = _acc_dtype_for(x.dtype)
    acc_itemsize = jnp.dtype(acc_dtype).itemsize
    acc_rows = SUBLANES * (4 // acc_itemsize)          # 8 for f32, 16 for bf16

    n_bulk = (n // LANES) * LANES
    rows = n_bulk // LANES
    if rows < acc_rows:
        # Less than one packed vreg-row group of data: plain jnp reduction.
        return (jnp.min(flat).astype(jnp.float32),
                jnp.max(flat).astype(jnp.float32))

    if n_bulk == n:
        bulk, tail = flat, None                        # zero-copy reshape below
    else:
        # TODO(synk): this prefix slice materializes a copy when n % 128 != 0;
        # removable only with element-level masking of a 1-D block.
        bulk, tail = flat[:n_bulk], flat[n_bulk:]
    x2d = bulk.reshape(rows, LANES)

    # Block sizing: ~TARGET_BLOCK_BYTES of accumulator-dtype data per DMA,
    # independent of the input dtype; always a multiple of acc_rows.
    target_rows = TARGET_BLOCK_BYTES // (LANES * acc_itemsize)
    if max_block_rows is not None:
        target_rows = min(target_rows, max_block_rows)
    target_rows = max(acc_rows, (target_rows // acc_rows) * acc_rows)
    blk_rows = min(target_rows, (rows // acc_rows) * acc_rows)

    grid_r = pl.cdiv(rows, blk_rows)
    valid_rows_last = rows - (grid_r - 1) * blk_rows
    needs_mask = valid_rows_last != blk_rows
    n_full_blocks = grid_r - 1 if needs_mask else grid_r

    # Two-way split of the block range across a leading "parallel" axis:
    # ~2x on v7x megacore (one block range per TensorCore), neutral on
    # single-TC v5e/v6e where it just runs serially.
    ncores = 2 if grid_r >= 2 else 1
    gph = pl.cdiv(grid_r, ncores)                      # blocks per core

    kernel = _make_minmax_kernel(blk_rows, grid_r, gph, n_full_blocks,
                                 valid_rows_last, needs_mask, acc_rows,
                                 acc_dtype)

    def in_index_map(c, j):
        # Clamp the (possibly out-of-range) final step of the last core; the
        # kernel skips compute for global block indices >= grid_r, so the
        # re-read block is never folded twice (and min/max is idempotent).
        return (jnp.minimum(c * gph + j, grid_r - 1), 0)

    min_parts, max_parts = pl.pallas_call(
        kernel,
        out_shape=(
            jax.ShapeDtypeStruct((ncores, acc_rows, LANES), acc_dtype),
            jax.ShapeDtypeStruct((ncores, acc_rows, LANES), acc_dtype),
        ),
        grid_spec=pltpu.PrefetchScalarGridSpec(
            num_scalar_prefetch=0,
            grid=(ncores, gph),
            in_specs=[pl.BlockSpec((blk_rows, LANES), in_index_map)],
            out_specs=[
                pl.BlockSpec((1, acc_rows, LANES), lambda c, j: (c, 0, 0)),
                pl.BlockSpec((1, acc_rows, LANES), lambda c, j: (c, 0, 0)),
            ],
        ),
        compiler_params=pltpu.CompilerParams(
            dimension_semantics=("parallel", "arbitrary"),
            vmem_limit_bytes=VMEM_LIMIT_BYTES),
    )(x2d)

    # Tiny lane-dense partials; the final reduce is trivial jnp fused into the
    # surrounding jit (no in-kernel cross-lane work on the hot path).
    kmin = jnp.min(min_parts).astype(jnp.float32)
    kmax = jnp.max(max_parts).astype(jnp.float32)
    if tail is not None:                                # < 128 leftover elements
        kmin = jnp.minimum(kmin, jnp.min(tail).astype(jnp.float32))
        kmax = jnp.maximum(kmax, jnp.max(tail).astype(jnp.float32))
    return kmin, kmax


@partial(jax.jit, static_argnames=("max_block_rows",))
def tensor_min_max(x, *, max_block_rows=None):
    """Global (min, max) of a tensor as two f32 scalars (Pallas reduction)."""
    return _tensor_min_max_impl(x, max_block_rows=max_block_rows)


@partial(jax.jit, static_argnames=("max_block_rows",))
def _observe(x, prev_min, prev_max, *, max_block_rows=None):
    """One observation = Pallas reduction + running min/max merge, one dispatch."""
    cur_min, cur_max = _tensor_min_max_impl(x, max_block_rows=max_block_rows)
    return jnp.minimum(cur_min, prev_min), jnp.maximum(cur_max, prev_max)


class Observer:
    """JAX/Pallas port of torch.quantization.observer.Observer."""

    def __init__(self, dtype="quint8", qscheme="per_tensor_affine"):
        assert qscheme in ("per_tensor_affine", "per_tensor_symmetric"), (
            "Default Observer only works for per_tensor_affine and "
            "per_tensor_symmetric quantization scheme")
        assert dtype in ("qint8", "quint8"), (
            "Default Observer only works for qint8 and quint8 data type")
        self.dtype = dtype
        self.qscheme = qscheme
        self.min_val = None
        self.max_val = None

    def forward(self, x):
        if self.min_val is None or self.max_val is None:
            prev_min = jnp.array(jnp.inf, dtype=jnp.float32)
            prev_max = jnp.array(-jnp.inf, dtype=jnp.float32)
        else:
            prev_min, prev_max = self.min_val, self.max_val
        self.min_val, self.max_val = _observe(x, prev_min, prev_max)

    __call__ = forward

    def calculate_qparams(self):
        if self.dtype == "qint8":
            qmin, qmax = (-128, 127)
        else:
            qmin, qmax = (0, 255)
        n_levels = 255.0
        if self.max_val is None or self.min_val is None:
            raise Exception("must run observer before calling calculate_qparams!")
        # Matches torch's .item(); forces a device sync (perf-only concern).
        max_val, min_val = float(self.max_val), float(self.min_val)
        if max_val == min_val:
            scale = 1.0
            zero_point = 0
        elif self.qscheme == "per_tensor_symmetric":
            max_val = max(-min_val, max_val)
            scale = max_val / 127.0
            scale = max(scale, _F32_EPS)
            zero_point = 0 if self.dtype == "qint8" else 128
        else:
            scale = (max_val - min_val) / n_levels
            scale = max(scale, _F32_EPS)
            zero_point = qmin - round(min_val / scale)
            zero_point = max(qmin, zero_point)
            zero_point = min(qmax, zero_point)
        return jnp.array([scale, zero_point], dtype=jnp.float32)


if __name__ == "__main__":
    key = jax.random.PRNGKey(0)
    k1, k2, k3, k4, k5, k6, k7 = jax.random.split(key, 7)

    # NCHW-shaped inputs, as the PyTorch observer would typically see.
    x1 = jax.random.normal(k1, (2, 4, 16, 16), dtype=jnp.float32)
    x2 = 3.0 * jax.random.normal(k2, (2, 4, 16, 16), dtype=jnp.float32) + 1.0

    obs = Observer(dtype="quint8", qscheme="per_tensor_affine")
    obs.forward(x1)          # first observation: sets min/max
    obs.forward(x2)          # second observation: running min/max update

    min_val = jax.block_until_ready(obs.min_val)
    max_val = jax.block_until_ready(obs.max_val)

    ref_min = jnp.minimum(jnp.min(x1), jnp.min(x2))
    ref_max = jnp.maximum(jnp.max(x1), jnp.max(x2))
    assert jnp.allclose(min_val, ref_min), (min_val, ref_min)
    assert jnp.allclose(max_val, ref_max), (max_val, ref_max)

    qparams = jax.block_until_ready(obs.calculate_qparams())
    assert qparams.shape == (2,)

    # Extra coverage of the auxiliary paths (kept small):
    # 1) tiny tensor -> pure-jnp fallback.
    x3 = jax.random.normal(k3, (3, 7, 5), dtype=jnp.float32)
    m3, M3 = tensor_min_max(x3)
    assert jnp.allclose(m3, jnp.min(x3)) and jnp.allclose(M3, jnp.max(x3))

    # 2) ragged (8-aligned) last block + 2-way core split of the block range.
    x4 = jax.random.normal(k4, (24, 128), dtype=jnp.float32)
    m4, M4 = tensor_min_max(x4, max_block_rows=16)
    assert jnp.allclose(m4, jnp.min(x4)) and jnp.allclose(M4, jnp.max(x4))

    # 3) row count not a multiple of 8 (125 rows) -> residual single-row folds.
    x5 = jax.random.normal(k5, (16, 1000), dtype=jnp.float32)
    m5, M5 = tensor_min_max(x5)
    assert jnp.allclose(m5, jnp.min(x5)) and jnp.allclose(M5, jnp.max(x5))

    # 4) element count not a multiple of 128 -> jnp tail merge.
    x6 = jax.random.normal(k6, (9, 130), dtype=jnp.float32)
    m6, M6 = tensor_min_max(x6)
    assert jnp.allclose(m6, jnp.min(x6)) and jnp.allclose(M6, jnp.max(x6))

    # 5) bf16 input: native bf16 fold in-kernel (exact), f32 cast at the end.
    x7 = jax.random.normal(k7, (32, 128), dtype=jnp.float32).astype(jnp.bfloat16)
    m7, M7 = tensor_min_max(x7)
    assert jnp.allclose(m7, jnp.min(x7).astype(jnp.float32))
    assert jnp.allclose(M7, jnp.max(x7).astype(jnp.float32))

    jax.block_until_ready((m3, M3, m4, M4, m5, M5, m6, M6, m7, M7))
    print("KERNEL_OK")
</pallas_src>

<mosaic_0001>
module attributes {stable_mosaic.version = 11 : i64} {
  func.func @kernel(%arg0: i32, %arg1: i32, %arg2: memref<16x128xf32, #tpu.memory_space<vmem>>, %arg3: memref<1x8x128xf32, #tpu.memory_space<vmem>>, %arg4: memref<1x8x128xf32, #tpu.memory_space<vmem>>) attributes {dimension_semantics = [#tpu.dimension_semantics<parallel>, #tpu.dimension_semantics<arbitrary>], iteration_bounds = array<i64: 1, 1>, scalar_prefetch = 0 : i64, scratch_operands = 0 : i64, tpu.core_type = #tpu.core_type<tc>, window_params = [{transform_indices = @transform_0, window_bounds = array<i64: 16, 128>}, {transform_indices = @transform_1, window_bounds = array<i64: 1, 8, 128>}, {transform_indices = @transform_2, window_bounds = array<i64: 1, 8, 128>}]} {
    %c1_i32 = arith.constant 1 : i32
    %0 = arith.muli %arg0, %c1_i32 : i32
    %1 = arith.addi %0, %arg1 : i32
    %c0_i32 = arith.constant 0 : i32
    %2 = arith.cmpi eq, %arg1, %c0_i32 : i32
    %3 = arith.extui %2 : i1 to i32
    %c0_i32_0 = arith.constant 0 : i32
    %4 = arith.cmpi ne, %3, %c0_i32_0 : i32
    scf.if %4 {
      %cst = arith.constant 0x7F800000 : f32
      %8 = vector.broadcast %cst : f32 to vector<1x8x128xf32>
      %c0 = arith.constant 0 : index
      %c0_3 = arith.constant 0 : index
      %c0_4 = arith.constant 0 : index
      %9 = vector.load %arg3[%c0, %c0_3, %c0_4] : memref<1x8x128xf32, #tpu.memory_space<vmem>>, vector<1x8x128xf32>
      tpu.vector_store %arg3[%c0, %c0_3, %c0_4], %8 {strides = array<i32>} : memref<1x8x128xf32, #tpu.memory_space<vmem>>, vector<1x8x128xf32>,
      %cst_5 = arith.constant 0xFF800000 : f32
      %10 = vector.broadcast %cst_5 : f32 to vector<1x8x128xf32>
      %c0_6 = arith.constant 0 : index
      %c0_7 = arith.constant 0 : index
      %c0_8 = arith.constant 0 : index
      %11 = vector.load %arg4[%c0_6, %c0_7, %c0_8] : memref<1x8x128xf32, #tpu.memory_space<vmem>>, vector<1x8x128xf32>
      tpu.vector_store %arg4[%c0_6, %c0_7, %c0_8], %10 {strides = array<i32>} : memref<1x8x128xf32, #tpu.memory_space<vmem>>, vector<1x8x128xf32>,
    } else {
    }
    %c1_i32_1 = arith.constant 1 : i32
    %5 = arith.cmpi slt, %1, %c1_i32_1 : i32
    %6 = arith.extui %5 : i1 to i32
    %c0_i32_2 = arith.constant 0 : i32
    %7 = arith.cmpi ne, %6, %c0_i32_2 : i32
    scf.if %7 {
      %c0 = arith.constant 0 : index
      %c0_3 = arith.constant 0 : index
      %8 = vector.load %arg2[%c0, %c0_3] : memref<16x128xf32, #tpu.memory_space<vmem>>, vector<16x128xf32>
      %9 = vector.shape_cast %8 : vector<16x128xf32> to vector<2x8x128xf32>
      %c0_4 = arith.constant 0 : index
      %c0_5 = arith.constant 0 : index
      %c0_6 = arith.constant 0 : index
      %10 = vector.load %arg3[%c0_4, %c0_5, %c0_6] : memref<1x8x128xf32, #tpu.memory_space<vmem>>, vector<1x8x128xf32>
      %11 = vector.shape_cast %10 : vector<1x8x128xf32> to vector<8x128xf32>
      %cst = arith.constant dense<0x7F800000> : vector<8x128xf32>
      %12 = vector.multi_reduction <minimumf>, %9, %cst [0] : vector<2x8x128xf32> to vector<8x128xf32>
      %13 = arith.minimumf %11, %12 : vector<8x128xf32>
      %c0_7 = arith.constant 0 : index
      %c0_8 = arith.constant 0 : index
      %c0_9 = arith.constant 0 : index
      %14 = vector.load %arg3[%c0_7, %c0_8, %c0_9] : memref<1x8x128xf32, #tpu.memory_space<vmem>>, vector<1x8x128xf32>
      %15 = vector.shape_cast %14 : vector<1x8x128xf32> to vector<8x128xf32>
      %16 = vector.shape_cast %13 : vector<8x128xf32> to vector<1x8x128xf32>
      tpu.vector_store %arg3[%c0_7, %c0_8, %c0_9], %16 {strides = array<i32>} : memref<1x8x128xf32, #tpu.memory_space<vmem>>, vector<1x8x128xf32>,
      %c0_10 = arith.constant 0 : index
      %c0_11 = arith.constant 0 : index
      %c0_12 = arith.constant 0 : index
      %17 = vector.load %arg4[%c0_10, %c0_11, %c0_12] : memref<1x8x128xf32, #tpu.memory_space<vmem>>, vector<1x8x128xf32>
      %18 = vector.shape_cast %17 : vector<1x8x128xf32> to vector<8x128xf32>
      %cst_13 = arith.constant dense<0xFF800000> : vector<8x128xf32>
      %19 = vector.multi_reduction <maximumf>, %9, %cst_13 [0] : vector<2x8x128xf32> to vector<8x128xf32>
      %20 = arith.maximumf %18, %19 : vector<8x128xf32>
      %c0_14 = arith.constant 0 : index
      %c0_15 = arith.constant 0 : index
      %c0_16 = arith.constant 0 : index
      %21 = vector.load %arg4[%c0_14, %c0_15, %c0_16] : memref<1x8x128xf32, #tpu.memory_space<vmem>>, vector<1x8x128xf32>
      %22 = vector.shape_cast %21 : vector<1x8x128xf32> to vector<8x128xf32>
      %23 = vector.shape_cast %20 : vector<8x128xf32> to vector<1x8x128xf32>
      tpu.vector_store %arg4[%c0_14, %c0_15, %c0_16], %23 {strides = array<i32>} : memref<1x8x128xf32, #tpu.memory_space<vmem>>, vector<1x8x128xf32>,
    } else {
    }
    return
  }
  func.func @transform_0(%arg0: i32, %arg1: i32) -> (i32, i32) {
    %c1_i32 = arith.constant 1 : i32
    %0 = arith.muli %arg0, %c1_i32 : i32
    %1 = arith.addi %0, %arg1 : i32
    %c0_i32 = arith.constant 0 : i32
    %2 = arith.minsi %1, %c0_i32 : i32
    %c0_i32_0 = arith.constant 0 : i32
    %c0_i32_1 = arith.constant 0 : i32
    return %2, %c0_i32_0 : i32, i32
  }
  func.func @transform_1(%arg0: i32, %arg1: i32) -> (i32, i32, i32) {
    %c0_i32 = arith.constant 0 : i32
    %c0_i32_0 = arith.constant 0 : i32
    %c0_i32_1 = arith.constant 0 : i32
    return %arg0, %c0_i32, %c0_i32_0 : i32, i32, i32
  }
  func.func @transform_2(%arg0: i32, %arg1: i32) -> (i32, i32, i32) {
    %c0_i32 = arith.constant 0 : i32
    %c0_i32_0 = arith.constant 0 : i32
    %c0_i32_1 = arith.constant 0 : i32
    return %arg0, %c0_i32, %c0_i32_0 : i32, i32, i32
  }
}

</mosaic_0001>

<llo_original>
// kernel: _observe.1
$region0: #{_observe.1}
  #allocation0 [shape = 'u32[]', space=smem, size = 0x4, offset = 0x4, fixed_abs, tag = 'smem constant byte address 0x4 - core index']
  #allocation1 [shape = 'u32[144,128]{1,0:T(1,128)}', space=vmem, size = 0x12000, scoped, tag = 'internal scratch']
  %s0 = inlined_call_operand.vmem [shape: f32[16,128], index: 0, kind: input, shape index: {}]
  %s1 = inlined_call_operand.vmem [shape: f32[1,8,128], index: 1, kind: output, shape index: {0}]
  %s2 = inlined_call_operand.vmem [shape: f32[1,8,128], index: 2, kind: output, shape index: {1}]
  %3 = xla_tuple %s1, %s2
  %s4 = sld [smem:[#allocation0]]
  $region30: #{_observe.1} parent=0
    _
  %s6 = ssub.s32 1, %s4
  %s7 = scalar_select 0, %s6, %s4
  // Predicated region
  $region2: #{_observe.1} parent=0 // pred_check
    _
  $region3: #{_observe.1} parent=0 // pred_check_branch
    %9 = sbr.rel (0) target = $region5
  $region4: #{_observe.1} parent=0 // pred_region
    %s10 = sadd.s32 0, 0
    %p11 = scmp.lt.s32.totalorder %s10, 0
    %s12 = scalar_select %p11, %s10, 0
    %s13 = smul.u32 2, %s12
    %p14 = scmp.lt.s32.totalorder %s13, 1
    %s15 = scalar_select %p14, %s13, 1
    %s16 = smul.addr %s15, 8
    %s17 = scalar_lea.vmem %s0, %s16
    %s18 = sadd.s32 0, 0
    %p19 = scmp.lt.s32.totalorder %s18, 0
    %s20 = scalar_select %p19, %s18, 0
    %s21 = smul.u32 2, %s20
  $region5: #{_observe.1} parent=0 // pred_fallthru
    _
  %s22 = sadd.s32 0, 0
  %p23 = scmp.lt.s32.totalorder %s22, 0
  %s24 = scalar_select %p23, %s22, 0
  %s25 = smul.u32 2, %s24
  %p26 = scmp.lt.s32.totalorder %s25, 1
  %s27 = scalar_select %p26, %s25, 1
  %s28 = smul.addr %s27, 8
  %s29 = scalar_lea.vmem %s0, %s28
  %s30 = sadd.s32 0, 0
  %p31 = scmp.lt.s32.totalorder %s30, 0
  %s32 = scalar_select %p31, %s30, 0
  %s33 = smul.u32 2, %s32
  %p34 = scmp.lt.s32.totalorder %s33, 1
  %s35 = scalar_select %p34, %s33, 1
  %s36 = smul.addr %s35, 8
  %s37 = scalar_lea.vmem %s0, %s36
  %s38 = sadd.s32 0, 0
  %p39 = scmp.lt.s32.totalorder %s38, 0
  %s40 = scalar_select %p39, %s38, 0
  %s41 = smul.u32 2, %s40
  %s42 = sadd.s32 0, 0
  %p43 = scmp.eq.s32.totalorder 0, 0
  // Predicated region
  $region6: #{_observe.1} parent=0 // pred_check
    %p44 = pneg %p43
  $region7: #{_observe.1} parent=0 // pred_check_branch
    %46 = sbr.rel (%p44) target = $region9
  $region8: #{_observe.1} parent=0 // pred_region
    %47 = vst [vmem:[%s1] sm:$0xff] inf
    %48 = vst [vmem:[%s2] sm:$0xff] -inf
  $region9: #{_observe.1} parent=0 // pred_fallthru
    _
  %p49 = scmp.lt.s32.totalorder %s42, 1
  // Predicated region
  $region10: #{_observe.1} parent=0 // pred_check
    %p50 = pneg %p49
  $region11: #{_observe.1} parent=0 // pred_check_branch
    %52 = sbr.rel (%p50) target = $region13
  $region12: #{_observe.1} parent=0 // pred_region
    %v53 = vld [vmem:[%s37] sm:$0xff]
    %v54 = vld [vmem:[%s37 + $0x8] sm:$0xff]
    %v55 = vld [vmem:[%s1] sm:$0xff]
    %v56 = vmin.f32 %v53, %v54
    %v57 = vmin.f32 %v55, %v56
    %58 = vst [vmem:[%s1] sm:$0xff] %v57
    %v59 = vld [vmem:[%s2] sm:$0xff]
    %v60 = vmax.f32 %v53, %v54
    %v61 = vmax.f32 %v59, %v60
    %62 = vst [vmem:[%s2] sm:$0xff] %v61
  $region13: #{_observe.1} parent=0 // pred_fallthru
    _
  // Predicated region
  $region14: #{_observe.1} parent=0 // pred_check
    _
  $region15: #{_observe.1} parent=0 // pred_check_branch
    %64 = sbr.rel (0) target = $region17
  $region16: #{_observe.1} parent=0 // pred_region
    _
  $region17: #{_observe.1} parent=0 // pred_fallthru
    _
  // Predicated region
  $region18: #{_observe.1} parent=0 // pred_check
    _
  $region19: #{_observe.1} parent=0 // pred_check_branch
    %66 = sbr.rel (0) target = $region21
  $region20: #{_observe.1} parent=0 // pred_region
    _
  $region21: #{_observe.1} parent=0 // pred_fallthru
    _
  // Predicated region
  $region22: #{_observe.1} parent=0 // pred_check
    _
  $region23: #{_observe.1} parent=0 // pred_check_branch
    %68 = sbr.rel (0) target = $region25
  $region24: #{_observe.1} parent=0 // pred_region
    _
  $region25: #{_observe.1} parent=0 // pred_fallthru
    _
  // Predicated region
  $region26: #{_observe.1} parent=0 // pred_check
    _
  $region27: #{_observe.1} parent=0 // pred_check_branch
    %70 = sbr.rel (0) target = $region29
  $region28: #{_observe.1} parent=0 // pred_region
    _
  $region29: #{_observe.1} parent=0 // pred_fallthru
    _

</llo_original>
